<compile_context>
chip_gen: v6e
topology: v6e:2x2x1
jax: 0.10.0
libtpu: 0.0.40
codegen_flags: <defaults>
</compile_context>

<pallas_src>
import functools

import jax
import jax.numpy as jnp
from jax.experimental import pallas as pl
from jax.experimental.pallas import tpu as pltpu


def _pool_sum_max_kernel(x_ref, sum_ref, max_ref, sum_acc, max_acc, *,
                         hw, n_inner, first_masked):
    """Grid = (spatial_split, batch, spatial tiles).

    x_ref   : (1, C, TILE_S) block of x  (C on sublanes, spatial on lanes)
    sum_ref : (1, 1, C, 1) partial spatial sum for this (split, batch) cell
    max_ref : (1, 1, C, 1) partial spatial max for this (split, batch) cell
    sum_acc / max_acc : (C, 1) f32 running accumulators (VMEM scratch)

    hw           : total number of spatial elements (H*W)
    n_inner      : number of spatial tiles handled per (split, batch) cell
    first_masked : smallest *global* tile index that needs lane masking
                   (ragged last real tile and/or clamped duplicate tiles),
                   or None if no tile ever needs masking.
    """
    k = pl.program_id(2)
    tile_s = x_ref.shape[2]

    # ---- init accumulators on the first tile of this (split, batch) cell
    @pl.when(k == 0)
    def _():
        sum_acc[...] = jnp.zeros_like(sum_acc)
        max_acc[...] = jnp.full_like(max_acc, -jnp.inf)

    x = x_ref[0].astype(jnp.float32)                      # (C, TILE_S)

    def accumulate(x_for_sum, x_for_max):
        sum_acc[...] += jnp.sum(x_for_sum, axis=-1, keepdims=True)
        max_acc[...] = jnp.maximum(
            max_acc[...], jnp.max(x_for_max, axis=-1, keepdims=True))

    if first_masked is None:
        # No tile ever needs masking: pure streaming reduce (memory-bound).
        accumulate(x, x)
    else:
        g = pl.program_id(0) * n_inner + k                # global tile index

        # Fast path: full tiles, no masking work at all.
        @pl.when(g < first_masked)
        def _():
            accumulate(x, x)

        # Slow path: ragged last tile and/or fully-OOB duplicate tiles
        # (index_map clamps their DMA to the last real block).  Runs on at
        # most one tile per (split, batch) cell.
        @pl.when(g >= first_masked)
        def _():
            rem = hw - g * tile_s                         # valid lanes (<=0 for dups)
            lane = jax.lax.broadcasted_iota(jnp.int32, (1, tile_s), 1)
            valid = lane < rem                            # (1, TILE_S), broadcasts vs (C, TILE_S)
            accumulate(jnp.where(valid, x, 0.0),
                       jnp.where(valid, x, -jnp.inf))

    # ---- flush partial results once per (split, batch) cell
    @pl.when(k == n_inner - 1)
    def _():
        sum_ref[0, 0] = sum_acc[...]
        max_ref[0, 0] = max_acc[...]


def _vmem_capacity_bytes():
    """Physical VMEM of the local chip; conservative fallback if unavailable."""
    try:
        return int(pltpu.get_tpu_info().vmem_capacity_bytes)
    except Exception:  # pragma: no cover - e.g. interpret mode
        return 64 * 1024 * 1024


def _pick_tiling(hw, c, itemsize, spatial_tile, spatial_split):
    """Generation-aware spatial tile, split factor and VMEM limit."""
    vmem_cap = _vmem_capacity_bytes()
    small_vmem = vmem_cap < 100 * 1024 * 1024   # v7x: 64 MiB/TC; v5e/v6e: 128 MiB

    if small_vmem:
        # v7x: higher HBM BW makes fixed per-step overhead costlier -> big
        # tiles, but only 64 MiB physical VMEM -> keep total <= ~48 MiB.
        working_budget = 40 * 1024 * 1024
        vmem_limit = 48 * 1024 * 1024
    else:
        # v5e/v6e: 128 MiB physical; default scoped limit (16/32 MiB) is
        # raised so two multi-MiB x buffers + f32 temporaries fit comfortably.
        working_budget = 48 * 1024 * 1024
        vmem_limit = 64 * 1024 * 1024

    if spatial_tile is None:
        # 2 pipeline buffers of the input dtype + ~2 tile-sized f32 temporaries.
        bytes_per_lane = c * (2 * itemsize + 2 * 4)
        budget_lanes = max(128, working_budget // max(1, bytes_per_lane))
        tile = min(hw, budget_lanes)
        tile = max(128, (tile // 128) * 128)
        if tile >= hw:
            tile = hw
    else:
        tile = min(int(spatial_tile), hw)
        if tile < hw:
            assert tile % 128 == 0, "spatial tile must be a multiple of 128 lanes"

    n_k = -(-hw // tile)  # cdiv

    if spatial_split is None:
        # 2-TC chips (v7x): split the spatial range so even B == 1 feeds both
        # TensorCores.  Single-TC chips: split = 1, so no duplicated DMA.
        split = 2 if (small_vmem and n_k >= 2) else 1
    else:
        split = max(1, min(int(spatial_split), n_k))

    n_inner = -(-n_k // split)
    return tile, n_k, split, n_inner, vmem_limit


def channel_gate(x_nchw, w1, b1, w2, b2, *, spatial_tile=None, spatial_split=None):
    """x: (B, C, H, W); w1: (C//r, C); b1: (C//r,); w2: (C, C//r); b2: (C,).

    Returns relu(mlp(avgpool(x)) + mlp(maxpool(x))) with shape (B, C, 1, 1),
    matching ChannelGate.forward (which returns the gate tensor itself).
    """
    B, C, H, W = x_nchw.shape
    HW = H * W
    x_flat = x_nchw.reshape(B, C, HW)

    tile, n_k, split, n_inner, vmem_limit = _pick_tiling(
        HW, C, x_flat.dtype.itemsize, spatial_tile, spatial_split)

    ragged = (HW % tile) != 0
    overshoot = (split * n_inner) != n_k     # duplicate tiles in the last split
    if ragged:
        first_masked = n_k - 1
    elif overshoot:
        first_masked = n_k
    else:
        first_masked = None

    last_block = n_k - 1

    def x_index_map(p, b, k):
        g = p * n_inner + k
        if overshoot:
            # Clamp fully-OOB duplicate tiles onto the last real block; the
            # kernel masks their contribution to exactly zero / -inf.
            g = jnp.minimum(g, last_block)
        return (b, 0, g)

    kernel = functools.partial(_pool_sum_max_kernel,
                               hw=HW, n_inner=n_inner, first_masked=first_masked)

    cost = pl.CostEstimate(
        flops=2 * B * C * HW,              # one add + one max per element
        transcendentals=0,
        bytes_accessed=x_flat.size * x_flat.dtype.itemsize + 2 * split * B * C * 4)

    sum_p, max_p = pl.pallas_call(
        kernel,
        out_shape=(jax.ShapeDtypeStruct((split, B, C, 1), jnp.float32),
                   jax.ShapeDtypeStruct((split, B, C, 1), jnp.float32)),
        grid_spec=pltpu.PrefetchScalarGridSpec(
            num_scalar_prefetch=0,
            grid=(split, B, n_inner),
            in_specs=[
                # streamed input slab: one batch element, full C, spatial tile
                pl.BlockSpec((1, C, tile), x_index_map),
            ],
            # partial pooled outputs stay resident across the spatial axis and
            # are written only in the finalize step of each (split, batch) cell
            out_specs=[pl.BlockSpec((1, 1, C, 1), lambda p, b, k: (p, b, 0, 0)),
                       pl.BlockSpec((1, 1, C, 1), lambda p, b, k: (p, b, 0, 0))],
            scratch_shapes=[
                pltpu.VMEM((C, 1), jnp.float32),   # running spatial sum
                pltpu.VMEM((C, 1), jnp.float32),   # running spatial max
            ],
        ),
        compiler_params=pltpu.CompilerParams(
            dimension_semantics=("parallel", "parallel", "arbitrary"),
            vmem_limit_bytes=vmem_limit),
        cost_estimate=cost,
    )(x_flat)

    # ---- combine partial pools (trivial XLA work) ----
    total_sum = jnp.sum(sum_p[..., 0], axis=0)          # (B, C) f32
    total_max = jnp.max(max_p[..., 0], axis=0)          # (B, C) f32
    avg = total_sum * jnp.float32(1.0 / HW)

    # ---- tiny biased MLP + final ReLU, hoisted out of the kernel ----
    w1f, b1f = w1.astype(jnp.float32), b1.astype(jnp.float32)
    w2f, b2f = w2.astype(jnp.float32), b2.astype(jnp.float32)

    def mlp(p):
        h = jnp.maximum(p @ w1f.T + b1f, 0.0)
        return h @ w2f.T + b2f

    scale = jnp.maximum(mlp(avg) + mlp(total_max), 0.0)
    return scale.reshape(B, C, 1, 1).astype(x_nchw.dtype)


def channel_gate_ref(x_nchw, w1, b1, w2, b2):
    """Pure-JAX reference mirroring the PyTorch ChannelGate forward."""
    xf = x_nchw.astype(jnp.float32)
    avg = jnp.mean(xf, axis=(2, 3))                     # (B, C)
    mx = jnp.max(xf, axis=(2, 3))                       # (B, C)
    w1f, b1f = w1.astype(jnp.float32), b1.astype(jnp.float32)
    w2f, b2f = w2.astype(jnp.float32), b2.astype(jnp.float32)

    def mlp(p):
        h = jnp.maximum(p @ w1f.T + b1f, 0.0)
        return h @ w2f.T + b2f

    scale = jnp.maximum(mlp(avg) + mlp(mx), 0.0)
    B, C = scale.shape
    return scale.reshape(B, C, 1, 1).astype(x_nchw.dtype)


if __name__ == "__main__":
    # Module-consistent small shapes: gate_channels=32, reduction_ratio=10.
    B, C, H, W = 2, 32, 16, 16
    ratio = 10
    Cr = max(1, C // ratio)  # 3

    key = jax.random.PRNGKey(0)
    kx, k1, kb1, k2, kb2 = jax.random.split(key, 5)

    x = jax.random.normal(kx, (B, C, H, W), dtype=jnp.float32)
    # nn.Linear(C, Cr): weight (Cr, C), bias (Cr,)
    w1 = jax.random.normal(k1, (Cr, C), dtype=jnp.float32) / jnp.sqrt(C)
    b1 = jax.random.normal(kb1, (Cr,), dtype=jnp.float32) * 0.1
    # nn.Linear(Cr, C): weight (C, Cr), bias (C,)
    w2 = jax.random.normal(k2, (C, Cr), dtype=jnp.float32) / jnp.sqrt(Cr)
    b2 = jax.random.normal(kb2, (C,), dtype=jnp.float32) * 0.1

    # 1) Default auto tiling / auto split (tiny spatial -> single tile).
    out = jax.block_until_ready(channel_gate(x, w1, b1, w2, b2))
    ref = channel_gate_ref(x, w1, b1, w2, b2)
    assert out.shape == (B, C, 1, 1)
    assert jnp.allclose(out, ref, atol=1e-5, rtol=1e-5), "mismatch (dense)"

    # 2) Streaming path with ragged last tile AND forced 2-way spatial split
    #    (H*W = 324 = 2*128 + 68, n_k = 3 -> exercises clamped duplicate tile).
    H2, W2 = 18, 18
    x2 = jax.random.normal(kx, (B, C, H2, W2), dtype=jnp.float32)
    ref2 = channel_gate_ref(x2, w1, b1, w2, b2)
    out2 = jax.block_until_ready(
        channel_gate(x2, w1, b1, w2, b2, spatial_tile=128, spatial_split=2))
    assert out2.shape == (B, C, 1, 1)
    assert jnp.allclose(out2, ref2, atol=1e-5, rtol=1e-5), "mismatch (split)"

    # 3) Streaming path, single split, ragged last tile.
    out3 = jax.block_until_ready(
        channel_gate(x2, w1, b1, w2, b2, spatial_tile=128, spatial_split=1))
    assert jnp.allclose(out3, ref2, atol=1e-5, rtol=1e-5), "mismatch (tiled)"

    print("KERNEL_OK")
</pallas_src>

<mosaic_0001>
module attributes {stable_mosaic.version = 11 : i64} {
  func.func @_pool_sum_max_kernel(%arg0: i32, %arg1: i32, %arg2: i32, %arg3: memref<1x32x256xf32, #tpu.memory_space<vmem>>, %arg4: memref<1x1x32x1xf32, #tpu.memory_space<vmem>>, %arg5: memref<1x1x32x1xf32, #tpu.memory_space<vmem>>, %arg6: memref<32x1xf32, #tpu.memory_space<vmem>>, %arg7: memref<32x1xf32, #tpu.memory_space<vmem>>) attributes {dimension_semantics = [#tpu.dimension_semantics<parallel>, #tpu.dimension_semantics<parallel>, #tpu.dimension_semantics<arbitrary>], iteration_bounds = array<i64: 1, 2, 1>, scalar_prefetch = 0 : i64, scratch_operands = 2 : i64, tpu.core_type = #tpu.core_type<tc>, window_params = [{transform_indices = @transform_0, window_bounds = array<i64: 1, 32, 256>}, {transform_indices = @transform_1, window_bounds = array<i64: 1, 1, 32, 1>}, {transform_indices = @transform_2, window_bounds = array<i64: 1, 1, 32, 1>}]} {
    %c0_i32 = arith.constant 0 : i32
    %0 = arith.cmpi eq, %arg2, %c0_i32 : i32
    %1 = arith.extui %0 : i1 to i32
    %c0_i32_0 = arith.constant 0 : i32
    %2 = arith.cmpi ne, %1, %c0_i32_0 : i32
    scf.if %2 {
      %cst_14 = arith.constant 0.000000e+00 : f32
      %18 = vector.broadcast %cst_14 : f32 to vector<32x1xf32>
      %c0_15 = arith.constant 0 : index
      %c0_16 = arith.constant 0 : index
      %19 = vector.load %arg6[%c0_15, %c0_16] : memref<32x1xf32, #tpu.memory_space<vmem>>, vector<32x1xf32>
      tpu.vector_store %arg6[%c0_15, %c0_16], %18 {strides = array<i32>} : memref<32x1xf32, #tpu.memory_space<vmem>>, vector<32x1xf32>,
      %cst_17 = arith.constant 0xFF800000 : f32
      %20 = vector.broadcast %cst_17 : f32 to vector<32x1xf32>
      %c0_18 = arith.constant 0 : index
      %c0_19 = arith.constant 0 : index
      %21 = vector.load %arg7[%c0_18, %c0_19] : memref<32x1xf32, #tpu.memory_space<vmem>>, vector<32x1xf32>
      tpu.vector_store %arg7[%c0_18, %c0_19], %20 {strides = array<i32>} : memref<32x1xf32, #tpu.memory_space<vmem>>, vector<32x1xf32>,
    } else {
    }
    %c0 = arith.constant 0 : index
    %c0_1 = arith.constant 0 : index
    %c0_2 = arith.constant 0 : index
    %3 = vector.load %arg3[%c0, %c0_1, %c0_2] : memref<1x32x256xf32, #tpu.memory_space<vmem>>, vector<1x32x256xf32>
    %4 = vector.shape_cast %3 : vector<1x32x256xf32> to vector<32x256xf32>
    %c0_3 = arith.constant 0 : index
    %c0_4 = arith.constant 0 : index
    %5 = vector.load %arg6[%c0_3, %c0_4] : memref<32x1xf32, #tpu.memory_space<vmem>>, vector<32x1xf32>
    %cst = arith.constant dense<0.000000e+00> : vector<32xf32>
    %6 = vector.multi_reduction <add>, %4, %cst [1] : vector<32x256xf32> to vector<32xf32>
    %7 = vector.shape_cast %6 : vector<32xf32> to vector<32x1xf32>
    %8 = arith.addf %5, %7 : vector<32x1xf32>
    %c0_5 = arith.constant 0 : index
    %c0_6 = arith.constant 0 : index
    %9 = vector.load %arg6[%c0_5, %c0_6] : memref<32x1xf32, #tpu.memory_space<vmem>>, vector<32x1xf32>
    tpu.vector_store %arg6[%c0_5, %c0_6], %8 {strides = array<i32>} : memref<32x1xf32, #tpu.memory_space<vmem>>, vector<32x1xf32>,
    %c0_7 = arith.constant 0 : index
    %c0_8 = arith.constant 0 : index
    %10 = vector.load %arg7[%c0_7, %c0_8] : memref<32x1xf32, #tpu.memory_space<vmem>>, vector<32x1xf32>
    %cst_9 = arith.constant dense<0xFF800000> : vector<32xf32>
    %11 = vector.multi_reduction <maximumf>, %4, %cst_9 [1] : vector<32x256xf32> to vector<32xf32>
    %12 = vector.shape_cast %11 : vector<32xf32> to vector<32x1xf32>
    %13 = arith.maximumf %10, %12 : vector<32x1xf32>
    %c0_10 = arith.constant 0 : index
    %c0_11 = arith.constant 0 : index
    %14 = vector.load %arg7[%c0_10, %c0_11] : memref<32x1xf32, #tpu.memory_space<vmem>>, vector<32x1xf32>
    tpu.vector_store %arg7[%c0_10, %c0_11], %13 {strides = array<i32>} : memref<32x1xf32, #tpu.memory_space<vmem>>, vector<32x1xf32>,
    %c0_i32_12 = arith.constant 0 : i32
    %15 = arith.cmpi eq, %arg2, %c0_i32_12 : i32
    %16 = arith.extui %15 : i1 to i32
    %c0_i32_13 = arith.constant 0 : i32
    %17 = arith.cmpi ne, %16, %c0_i32_13 : i32
    scf.if %17 {
      %c0_14 = arith.constant 0 : index
      %c0_15 = arith.constant 0 : index
      %18 = vector.load %arg6[%c0_14, %c0_15] : memref<32x1xf32, #tpu.memory_space<vmem>>, vector<32x1xf32>
      %c0_16 = arith.constant 0 : index
      %c0_17 = arith.constant 0 : index
      %c0_18 = arith.constant 0 : index
      %c0_19 = arith.constant 0 : index
      %19 = vector.load %arg4[%c0_16, %c0_17, %c0_18, %c0_19] : memref<1x1x32x1xf32, #tpu.memory_space<vmem>>, vector<1x1x32x1xf32>
      %20 = vector.shape_cast %19 : vector<1x1x32x1xf32> to vector<32x1xf32>
      %21 = vector.shape_cast %18 : vector<32x1xf32> to vector<1x1x32x1xf32>
      tpu.vector_store %arg4[%c0_16, %c0_17, %c0_18, %c0_19], %21 {strides = array<i32>} : memref<1x1x32x1xf32, #tpu.memory_space<vmem>>, vector<1x1x32x1xf32>,
      %c0_20 = arith.constant 0 : index
      %c0_21 = arith.constant 0 : index
      %22 = vector.load %arg7[%c0_20, %c0_21] : memref<32x1xf32, #tpu.memory_space<vmem>>, vector<32x1xf32>
      %c0_22 = arith.constant 0 : index
      %c0_23 = arith.constant 0 : index
      %c0_24 = arith.constant 0 : index
      %c0_25 = arith.constant 0 : index
      %23 = vector.load %arg5[%c0_22, %c0_23, %c0_24, %c0_25] : memref<1x1x32x1xf32, #tpu.memory_space<vmem>>, vector<1x1x32x1xf32>
      %24 = vector.shape_cast %23 : vector<1x1x32x1xf32> to vector<32x1xf32>
      %25 = vector.shape_cast %22 : vector<32x1xf32> to vector<1x1x32x1xf32>
      tpu.vector_store %arg5[%c0_22, %c0_23, %c0_24, %c0_25], %25 {strides = array<i32>} : memref<1x1x32x1xf32, #tpu.memory_space<vmem>>, vector<1x1x32x1xf32>,
    } else {
    }
    return
  }
  func.func @transform_0(%arg0: i32, %arg1: i32, %arg2: i32) -> (i32, i32, i32) {
    %c1_i32 = arith.constant 1 : i32
    %0 = arith.muli %arg0, %c1_i32 : i32
    %1 = arith.addi %0, %arg2 : i32
    %c0_i32 = arith.constant 0 : i32
    %c0_i32_0 = arith.constant 0 : i32
    return %arg1, %c0_i32, %1 : i32, i32, i32
  }
  func.func @transform_1(%arg0: i32, %arg1: i32, %arg2: i32) -> (i32, i32, i32, i32) {
    %c0_i32 = arith.constant 0 : i32
    %c0_i32_0 = arith.constant 0 : i32
    %c0_i32_1 = arith.constant 0 : i32
    return %arg0, %arg1, %c0_i32, %c0_i32_0 : i32, i32, i32, i32
  }
  func.func @transform_2(%arg0: i32, %arg1: i32, %arg2: i32) -> (i32, i32, i32, i32) {
    %c0_i32 = arith.constant 0 : i32
    %c0_i32_0 = arith.constant 0 : i32
    %c0_i32_1 = arith.constant 0 : i32
    return %arg0, %arg1, %c0_i32, %c0_i32_0 : i32, i32, i32, i32
  }
}

</mosaic_0001>

<llo_original>
// kernel: tpu_custom_call.1
$region0: #{tpu_custom_call.1}
  #allocation0 [shape = 'u32[]', space=smem, size = 0x4, offset = 0x4, fixed_abs, tag = 'smem constant byte address 0x4 - core index']
  #allocation1 [shape = 'u32[144,128]{1,0:T(1,128)}', space=vmem, size = 0x12000, scoped, tag = 'internal scratch']
  #allocation2 [shape = 'f32[32,1]{1,0:T(8,128)}', space=vmem, size = 0x4000, scoped, tag = 'scratch operand']
  #allocation3 [shape = 'f32[32,1]{1,0:T(8,128)}', space=vmem, size = 0x4000, scoped, tag = 'scratch operand']
  %s0 = inlined_call_operand.hbm [shape: f32[2,32,256], index: 0, kind: input, shape index: {}]
  %s1 = inlined_call_operand.vmem [shape: f32[1,2,32,1], index: 1, kind: output, shape index: {0}]
  %s2 = inlined_call_operand.vmem [shape: f32[1,2,32,1], index: 2, kind: output, shape index: {1}]
  %3 = xla_tuple %s1, %s2
  %s4 = sld [smem:[#allocation0]]
  $region57: #{tpu_custom_call.1} parent=0
    _
  %s6 = ssub.s32 1, %s4
  %s7 = scalar_select 0, %s6, %s4
  $region1: #{tpu_custom_call.1} parent=0
    #allocation4 [shape = 'u8[65536]{0}', space=vmem, size = 0x10000, scoped, tag = 'input window, operand 0']
    #allocation5 [shape = 's32[2]{0}', space=sflag, size = 0x8, scoped, tag = 'scoped memory for tpu_custom_call.1']
    %8 = vsyncpa [#allocation5], 0
    %s9 = scalar_lea.sflag [#allocation5], 1
    %10 = vsyncpa %s9, 0
    loop: start=0, step=1, limit=4
    $region2: #{tpu_custom_call.1} parent=1 // loop_pre_header
      _
    $region3: #{tpu_custom_call.1} parent=1 // loop_header
      %s12 = sphi 0, %s16
      %p13 = scmp.ge.s32.totalorder %s12, 4
      %s19 = sphi 0, %s38
      %s20 = sphi 0, %s34
      %s21 = sphi 0, %s30
      %s22 = sphi 0, %s19
      %s23 = sphi 0, %s20
      %s24 = sphi 0, %s21
      %s25 = sphi 0, %s22
      %s26 = sphi 0, %s23
      %s27 = sphi 0, %s24
      %s45 = sphi 0, %s47
      %s48 = sphi 0, %s45
      %s49 = sphi 0, %s48
      %s65 = sphi 0, %s49
      %s73 = sphi 0, %s75
      %s76 = sphi 0, %s73
      %s77 = sphi 0, %s76
      %s93 = sphi 0, %s77
      %s101 = sphi 0, %s103
      %s104 = sphi 0, %s101
      %s105 = sphi 0, %s104
      %s121 = sphi 0, %s105
    $region4: #{tpu_custom_call.1} parent=1 // loop_header_branch
      %15 = sbr.rel (%p13) target = $region8
    $region5: #{tpu_custom_call.1} parent=1 // loop_body
      %s17 = ssub.s32 %s12, 1
      %s18 = ssub.s32 %s12, 2
      %s28 = sadd.s32 1, %s21
      %p29 = scmp.ge.s32.totalorder %s28, 1
      %s30 = scalar_select %p29, 0, %s28
      %s31 = sadd.s32 1, %s20
      %s32 = scalar_select %p29, %s31, %s20
      %p33 = scmp.ge.s32.totalorder %s32, 2
      %s34 = scalar_select %p33, 0, %s32
      %s35 = sadd.s32 1, %s19
      %s36 = scalar_select %p33, %s35, %s19
      %p37 = scmp.ge.s32.totalorder %s36, 1
      %s38 = scalar_select %p37, 0, %s36
      %s39 = sadd.s32 %s19, %s21
      %s40 = sadd.s32 %s38, %s30
      %s41 = ssub.s32 %s20, %s34
      %s42 = ssub.s32 %s39, %s40
      %s43 = sor.u32 %s41, %s42
      %p44 = scmp.eq.s32.totalorder %s43, 0
      %s46 = sadd.s32 %s45, 1
      %s47 = scalar_select %p44, %s45, %s46
      %p50 = pneg %p44
      %p51 = scmp.eq.s32.totalorder %s12, 1
      %p52 = por %p50, %p51
      %p53 = scmp.ne.s32.totalorder %s45, %s48
      %p54 = scmp.eq.s32.totalorder %s12, 0
      %p55 = por %p53, %p54
      %p56 = scmp.ne.s32.totalorder %s45, %s48
      %p57 = scmp.eq.s32.totalorder %s17, 1
      %p58 = por %p56, %p57
      %p59 = scmp.ne.s32.totalorder %s48, %s49
      %p60 = scmp.eq.s32.totalorder %s17, 0
      %p61 = por %p59, %p60
      %p62 = scmp.ne.s32.totalorder %s48, %s49
      %p63 = scmp.eq.s32.totalorder %s18, 1
      %p64 = por %p62, %p63
      %p66 = scmp.ne.s32.totalorder %s49, %s65
      %p67 = scmp.eq.s32.totalorder %s18, 0
      %p68 = por %p66, %p67
      %s69 = ssub.s32 %s19, %s38
      %s70 = ssub.s32 %s20, %s34
      %s71 = sor.u32 %s69, %s70
      %p72 = scmp.eq.s32.totalorder %s71, 0
      %s74 = sadd.s32 %s73, 1
      %s75 = scalar_select %p72, %s73, %s74
      %p78 = pneg %p72
      %p79 = scmp.eq.s32.totalorder %s12, 1
      %p80 = por %p78, %p79
      %p81 = scmp.ne.s32.totalorder %s73, %s76
      %p82 = scmp.eq.s32.totalorder %s12, 0
      %p83 = por %p81, %p82
      %p84 = scmp.ne.s32.totalorder %s73, %s76
      %p85 = scmp.eq.s32.totalorder %s17, 1
      %p86 = por %p84, %p85
      %p87 = scmp.ne.s32.totalorder %s76, %s77
      %p88 = scmp.eq.s32.totalorder %s17, 0
      %p89 = por %p87, %p88
      %p90 = scmp.ne.s32.totalorder %s76, %s77
      %p91 = scmp.eq.s32.totalorder %s18, 1
      %p92 = por %p90, %p91
      %p94 = scmp.ne.s32.totalorder %s77, %s93
      %p95 = scmp.eq.s32.totalorder %s18, 0
      %p96 = por %p94, %p95
      %s97 = ssub.s32 %s19, %s38
      %s98 = ssub.s32 %s20, %s34
      %s99 = sor.u32 %s97, %s98
      %p100 = scmp.eq.s32.totalorder %s99, 0
      %s102 = sadd.s32 %s101, 1
      %s103 = scalar_select %p100, %s101, %s102
      %p106 = pneg %p100
      %p107 = scmp.eq.s32.totalorder %s12, 1
      %p108 = por %p106, %p107
      %p109 = scmp.ne.s32.totalorder %s101, %s104
      %p110 = scmp.eq.s32.totalorder %s12, 0
      %p111 = por %p109, %p110
      %p112 = scmp.ne.s32.totalorder %s101, %s104
      %p113 = scmp.eq.s32.totalorder %s17, 1
      %p114 = por %p112, %p113
      %p115 = scmp.ne.s32.totalorder %s104, %s105
      %p116 = scmp.eq.s32.totalorder %s17, 0
      %p117 = por %p115, %p116
      %p118 = scmp.ne.s32.totalorder %s104, %s105
      %p119 = scmp.eq.s32.totalorder %s18, 1
      %p120 = por %p118, %p119
      %p122 = scmp.ne.s32.totalorder %s105, %s121
      %p123 = scmp.eq.s32.totalorder %s18, 0
      %p124 = por %p122, %p123
      %p125 = scmp.le.s32.totalorder 1, %s12
      %p126 = scmp.lt.s32.totalorder %s12, 3
      %p127 = pnand %p125, %p126
      %p128 = pneg %p127
      // Predicated region
      $region9: #{tpu_custom_call.1} parent=5 // pred_check
        _
      $region10: #{tpu_custom_call.1} parent=5 // pred_check_branch
        %130 = sbr.rel (%p127) target = $region12
      $region11: #{tpu_custom_call.1} parent=5 // pred_region
        %s131 = ssub.s32 %s12, 1
      $region12: #{tpu_custom_call.1} parent=5 // pred_fallthru
        _
      %p132 = scmp.lt.s32.totalorder %s12, 2
      // Predicated region
      $region13: #{tpu_custom_call.1} parent=5 // pred_check
        %p133 = pneg %p132
      $region14: #{tpu_custom_call.1} parent=5 // pred_check_branch
        %135 = sbr.rel (%p133) target = $region16
      $region15: #{tpu_custom_call.1} parent=5 // pred_region
        // Predicated region
        $region17: #{tpu_custom_call.1} parent=15 // pred_check
          %p136 = pneg %p55
        $region18: #{tpu_custom_call.1} parent=15 // pred_check_branch
          %138 = sbr.rel (%p136) target = $region20
        $region19: #{tpu_custom_call.1} parent=15 // pred_region
          %s139 = sand.u32 %s45, 1
          %s140 = scalar_lea.sflag [#allocation5], %s139
          %s141 = sand.u32 %s45, 1
          %s142 = smul.addr %s141, 64
          %s143 = scalar_lea.vmem [#allocation4], %s142
          %s144 = sadd.s32 %s19, %s21
          %s145 = smul.u32 2, %s144
          %s147 = ssub.s32 1024, 1024
          %148 = vsyncadd %s140, %s147
          %s149 = smul.addr %s20, 8
          %s150 = sadd.s32 %s145, %s149
          %s151 = smul.addr %s150, 128
          %s152 = scalar_lea.hbm %s0, %s151
          %s153 = sshll.u32 %s143, 4
          %s154 = int_to_ptr.vmem [resolvable:$true] %s153
          %159 = dma.hbm_to_vmem [thread:$0]  %s152, 1024, %s154, %s140, 256, 256, 16
        $region20: #{tpu_custom_call.1} parent=15 // pred_fallthru
          _
      $region16: #{tpu_custom_call.1} parent=5 // pred_fallthru
        _
      %p160 = scmp.le.s32.totalorder 1, %s12
      %p161 = scmp.lt.s32.totalorder %s12, 3
      %p162 = pnand %p160, %p161
      %p163 = pneg %p162
      // Predicated region
      $region21: #{tpu_custom_call.1} parent=5 // pred_check
        _
      $region22: #{tpu_custom_call.1} parent=5 // pred_check_branch
        %165 = sbr.rel (%p162) target = $region24
      $region23: #{tpu_custom_call.1} parent=5 // pred_region
        %s166 = ssub.s32 %s12, 1
        %s167 = sand.u32 %s48, 1
        %s168 = scalar_lea.sflag [#allocation5], %s167
        %s169 = sand.u32 %s48, 1
        %s170 = smul.addr %s169, 64
        %s171 = scalar_lea.vmem [#allocation4], %s170
        // Predicated region
        $region25: #{tpu_custom_call.1} parent=23 // pred_check
          %p172 = pneg %p61
        $region26: #{tpu_custom_call.1} parent=23 // pred_check_branch
          %174 = sbr.rel (%p172) target = $region28
        $region27: #{tpu_custom_call.1} parent=23 // pred_region
          %175 = dma.done %s168, 1024
        $region28: #{tpu_custom_call.1} parent=23 // pred_fallthru
          _
        %s176 = sand.u32 %s48, 1
        %s177 = scalar_lea.sflag [#allocation5], %s176
        %s178 = sand.u32 %s48, 1
        %s179 = smul.addr %s178, 64
        %s180 = scalar_lea.vmem [#allocation4], %s179
        %p181 = pneg %p61
        %p182 = pneg %p58
        %p183 = pneg %p89
        %p184 = pneg %p86
        %p185 = scmp.lt.s32.totalorder %s22, 0
        %s186 = scalar_select %p185, %s22, 0
        %p187 = scmp.lt.s32.totalorder %s23, 1
        %s188 = scalar_select %p187, %s23, 1
        %s189 = smul.addr %s188, 4
        %s190 = smul.addr %s186, 8
        %s191 = sadd.s32 %s189, %s190
        %s192 = smul.addr %s191, 8
        %s193 = scalar_lea.vmem %s1, %s192
        %p194 = pneg %p117
        %p195 = pneg %p114
        %p196 = scmp.lt.s32.totalorder %s22, 0
        %s197 = scalar_select %p196, %s22, 0
        %p198 = scmp.lt.s32.totalorder %s23, 1
        %s199 = scalar_select %p198, %s23, 1
        %s200 = smul.addr %s199, 4
        %s201 = smul.addr %s197, 8
        %s202 = sadd.s32 %s200, %s201
        %s203 = smul.addr %s202, 8
        %s204 = scalar_lea.vmem %s2, %s203
        %s205 = sadd.s32 %s22, %s24
        %s206 = smul.u32 2, %s205
        %p207 = scmp.lt.s32.totalorder %s22, 0
        %s208 = scalar_select %p207, %s22, 0
        %p209 = scmp.lt.s32.totalorder %s23, 1
        %s210 = scalar_select %p209, %s23, 1
        %s211 = smul.addr %s210, 4
        %s212 = smul.addr %s208, 8
        %s213 = sadd.s32 %s211, %s212
        %s214 = smul.addr %s213, 8
        %s215 = scalar_lea.vmem %s1, %s214
        %p216 = scmp.lt.s32.totalorder %s22, 0
        %s217 = scalar_select %p216, %s22, 0
        %p218 = scmp.lt.s32.totalorder %s23, 1
        %s219 = scalar_select %p218, %s23, 1
        %s220 = smul.addr %s219, 4
        %s221 = smul.addr %s217, 8
        %s222 = sadd.s32 %s220, %s221
        %s223 = smul.addr %s222, 8
        %s224 = scalar_lea.vmem %s2, %s223
        %p225 = scmp.eq.s32.totalorder %s24, 0
        // Predicated region
        $region29: #{tpu_custom_call.1} parent=23 // pred_check
          %p226 = pneg %p225
        $region30: #{tpu_custom_call.1} parent=23 // pred_check_branch
          %228 = sbr.rel (%p226) target = $region32
        $region31: #{tpu_custom_call.1} parent=23 // pred_region
          %vm229 = vcmask 7168
          %230 = vst.msk [vmem:[#allocation2] sm:$0xff] %vm229, 0.0
          %231 = vst.msk [vmem:[#allocation2 + $0x8] sm:$0xff] %vm229, 0.0
          %232 = vst.msk [vmem:[#allocation2 + $0x10] sm:$0xff] %vm229, 0.0
          %233 = vst.msk [vmem:[#allocation2 + $0x18] sm:$0xff] %vm229, 0.0
          %234 = vst.msk [vmem:[#allocation3] sm:$0xff] %vm229, -inf
          %235 = vst.msk [vmem:[#allocation3 + $0x8] sm:$0xff] %vm229, -inf
          %236 = vst.msk [vmem:[#allocation3 + $0x10] sm:$0xff] %vm229, -inf
          %237 = vst.msk [vmem:[#allocation3 + $0x18] sm:$0xff] %vm229, -inf
        $region32: #{tpu_custom_call.1} parent=23 // pred_fallthru
          _
        %v238 = vld [vmem:[%s171] sm:$0xff]
        %v239 = vld [vmem:[%s171 + $0x8] sm:$0xff]
        %v240 = vld [vmem:[%s171 + $0x10] sm:$0xff]
        %v241 = vld [vmem:[%s171 + $0x18] sm:$0xff]
        %v242 = vld [vmem:[%s171 + $0x20] sm:$0xff]
        %v243 = vld [vmem:[%s171 + $0x28] sm:$0xff]
        %v244 = vld [vmem:[%s171 + $0x30] sm:$0xff]
        %v245 = vld [vmem:[%s171 + $0x38] sm:$0xff]
        %v246 = vld [vmem:[#allocation2] sm:$0xff]
        %v247 = vld [vmem:[#allocation2 + $0x8] sm:$0xff]
        %v248 = vld [vmem:[#allocation2 + $0x10] sm:$0xff]
        %v249 = vld [vmem:[#allocation2 + $0x18] sm:$0xff]
        %v250 = vadd.f32 %v238, %v239
        %251 = vadd.xlane.f32.xlu0 %v250
        %v252 = vpop.xlane.xlu0 %251
        %v253 = vadd.f32 %v240, %v241
        %254 = vadd.xlane.f32.xlu0 %v253
        %v255 = vpop.xlane.xlu0 %254
        %v256 = vadd.f32 %v242, %v243
        %257 = vadd.xlane.f32.xlu0 %v256
        %v258 = vpop.xlane.xlu0 %257
        %v259 = vadd.f32 %v244, %v245
        %260 = vadd.xlane.f32.xlu0 %v259
        %v261 = vpop.xlane.xlu0 %260
        %v262 = vadd.f32 %v246, %v252
        %v263 = vadd.f32 %v247, %v255
        %v264 = vadd.f32 %v248, %v258
        %v265 = vadd.f32 %v249, %v261
        %vm266 = vcmask 7168
        %267 = vst.msk [vmem:[#allocation2] sm:$0xff] %vm266, %v262
        %268 = vst.msk [vmem:[#allocation2 + $0x8] sm:$0xff] %vm266, %v263
        %269 = vst.msk [vmem:[#allocation2 + $0x10] sm:$0xff] %vm266, %v264
        %270 = vst.msk [vmem:[#allocation2 + $0x18] sm:$0xff] %vm266, %v265
        %v271 = vld [vmem:[#allocation3] sm:$0xff]
        %v272 = vld [vmem:[#allocation3 + $0x8] sm:$0xff]
        %v273 = vld [vmem:[#allocation3 + $0x10] sm:$0xff]
        %v274 = vld [vmem:[#allocation3 + $0x18] sm:$0xff]
        %v275 = vmax.f32 %v238, %v239
        %276 = vmax.xlane.f32.xlu0 %v275
        %v277 = vpop.xlane.xlu0 %276
        %v278 = vmax.f32 %v240, %v241
        %279 = vmax.xlane.f32.xlu0 %v278
        %v280 = vpop.xlane.xlu0 %279
        %v281 = vmax.f32 %v242, %v243
        %282 = vmax.xlane.f32.xlu0 %v281
        %v283 = vpop.xlane.xlu0 %282
        %v284 = vmax.f32 %v244, %v245
        %285 = vmax.xlane.f32.xlu0 %v284
        %v286 = vpop.xlane.xlu0 %285
        %v287 = vmax.f32 %v271, %v277
        %v288 = vmax.f32 %v272, %v280
        %v289 = vmax.f32 %v273, %v283
        %v290 = vmax.f32 %v274, %v286
        %291 = vst.msk [vmem:[#allocation3] sm:$0xff] %vm266, %v287
        %292 = vst.msk [vmem:[#allocation3 + $0x8] sm:$0xff] %vm266, %v288
        %293 = vst.msk [vmem:[#allocation3 + $0x10] sm:$0xff] %vm266, %v289
        %294 = vst.msk [vmem:[#allocation3 + $0x18] sm:$0xff] %vm266, %v290
        // Predicated region
        $region33: #{tpu_custom_call.1} parent=23 // pred_check
          %p295 = pneg %p225
        $region34: #{tpu_custom_call.1} parent=23 // pred_check_branch
          %297 = sbr.rel (%p295) target = $region36
        $region35: #{tpu_custom_call.1} parent=23 // pred_region
          %v298 = vld [vmem:[#allocation2] sm:$0xff]
          %v299 = vld [vmem:[#allocation2 + $0x8] sm:$0xff]
          %v300 = vld [vmem:[#allocation2 + $0x10] sm:$0xff]
          %v301 = vld [vmem:[#allocation2 + $0x18] sm:$0xff]
          %302 = vst.msk [vmem:[%s215] sm:$0xff] %vm266, %v298
          %303 = vst.msk [vmem:[%s215 + $0x8] sm:$0xff] %vm266, %v299
          %304 = vst.msk [vmem:[%s215 + $0x10] sm:$0xff] %vm266, %v300
          %305 = vst.msk [vmem:[%s215 + $0x18] sm:$0xff] %vm266, %v301
          %v306 = vld [vmem:[#allocation3] sm:$0xff]
          %v307 = vld [vmem:[#allocation3 + $0x8] sm:$0xff]
          %v308 = vld [vmem:[#allocation3 + $0x10] sm:$0xff]
          %v309 = vld [vmem:[#allocation3 + $0x18] sm:$0xff]
          %310 = vst.msk [vmem:[%s224] sm:$0xff] %vm266, %v306
          %311 = vst.msk [vmem:[%s224 + $0x8] sm:$0xff] %vm266, %v307
          %312 = vst.msk [vmem:[%s224 + $0x10] sm:$0xff] %vm266, %v308
          %313 = vst.msk [vmem:[%s224 + $0x18] sm:$0xff] %vm266, %v309
        $region36: #{tpu_custom_call.1} parent=23 // pred_fallthru
          _
        %p314 = scmp.lt.s32.totalorder %s22, 0
        %s315 = scalar_select %p314, %s22, 0
        %p316 = scmp.lt.s32.totalorder %s23, 1
        %s317 = scalar_select %p316, %s23, 1
        %s318 = smul.addr %s317, 4
        %s319 = smul.addr %s315, 8
        %s320 = sadd.s32 %s318, %s319
        %s321 = smul.addr %s320, 8
        %s322 = scalar_lea.vmem %s1, %s321
        %p323 = scmp.lt.s32.totalorder %s22, 0
        %s324 = scalar_select %p323, %s22, 0
        %p325 = scmp.lt.s32.totalorder %s23, 1
        %s326 = scalar_select %p325, %s23, 1
        %s327 = smul.addr %s326, 4
        %s328 = smul.addr %s324, 8
        %s329 = sadd.s32 %s327, %s328
        %s330 = smul.addr %s329, 8
        %s331 = scalar_lea.vmem %s2, %s330
        // Predicated region
        $region37: #{tpu_custom_call.1} parent=23 // pred_check
          %p332 = pneg %p86
        $region38: #{tpu_custom_call.1} parent=23 // pred_check_branch
          %334 = sbr.rel (%p332) target = $region40
        $region39: #{tpu_custom_call.1} parent=23 // pred_region
          _
        $region40: #{tpu_custom_call.1} parent=23 // pred_fallthru
          _
        // Predicated region
        $region41: #{tpu_custom_call.1} parent=23 // pred_check
          %p335 = pneg %p114
        $region42: #{tpu_custom_call.1} parent=23 // pred_check_branch
          %337 = sbr.rel (%p335) target = $region44
        $region43: #{tpu_custom_call.1} parent=23 // pred_region
          _
        $region44: #{tpu_custom_call.1} parent=23 // pred_fallthru
          _
      $region24: #{tpu_custom_call.1} parent=5 // pred_fallthru
        _
      %p338 = scmp.le.s32.totalorder 2, %s12
      // Predicated region
      $region45: #{tpu_custom_call.1} parent=5 // pred_check
        %p339 = pneg %p338
      $region46: #{tpu_custom_call.1} parent=5 // pred_check_branch
        %341 = sbr.rel (%p339) target = $region48
      $region47: #{tpu_custom_call.1} parent=5 // pred_region
        %s342 = ssub.s32 %s12, 2
        // Predicated region
        $region49: #{tpu_custom_call.1} parent=47 // pred_check
          %p343 = pneg %p92
        $region50: #{tpu_custom_call.1} parent=47 // pred_check_branch
          %345 = sbr.rel (%p343) target = $region52
        $region51: #{tpu_custom_call.1} parent=47 // pred_region
          %p346 = scmp.lt.s32.totalorder %s25, 0
          %s347 = scalar_select %p346, %s25, 0
          %p348 = scmp.lt.s32.totalorder %s26, 1
          %s349 = scalar_select %p348, %s26, 1
          %s350 = smul.addr %s349, 4
          %s351 = smul.addr %s347, 8
          %s352 = sadd.s32 %s350, %s351
          %s353 = smul.addr %s352, 8
          %s354 = scalar_lea.vmem %s1, %s353
        $region52: #{tpu_custom_call.1} parent=47 // pred_fallthru
          _
        // Predicated region
        $region53: #{tpu_custom_call.1} parent=47 // pred_check
          %p355 = pneg %p120
        $region54: #{tpu_custom_call.1} parent=47 // pred_check_branch
          %357 = sbr.rel (%p355) target = $region56
        $region55: #{tpu_custom_call.1} parent=47 // pred_region
          %p358 = scmp.lt.s32.totalorder %s25, 0
          %s359 = scalar_select %p358, %s25, 0
          %p360 = scmp.lt.s32.totalorder %s26, 1
          %s361 = scalar_select %p360, %s26, 1
          %s362 = smul.addr %s361, 4
          %s363 = smul.addr %s359, 8
          %s364 = sadd.s32 %s362, %s363
          %s365 = smul.addr %s364, 8
          %s366 = scalar_lea.vmem %s2, %s365
        $region56: #{tpu_custom_call.1} parent=47 // pred_fallthru
          _
      $region48: #{tpu_custom_call.1} parent=5 // pred_fallthru
        _
    $region6: #{tpu_custom_call.1} parent=1 // loop_footer
      %s16 = sadd.s32 1, %s12
    $region7: #{tpu_custom_call.1} parent=1 // loop_footer_branch
      %11 = sbr.rel target = $region3
    $region8: #{tpu_custom_call.1} parent=1 // loop_exit
      _
    %367 = vsyncpa [#allocation5], 1
    %s368 = scalar_lea.sflag [#allocation5], 1
    %369 = vsyncpa %s368, 1

</llo_original>
